<compile_context>
chip_gen: v7x
topology: tpu7x:2x2x1
jax: 0.10.0
libtpu: 0.0.40
codegen_flags: <defaults>
</compile_context>

<pallas_src>
import functools

import jax
import jax.numpy as jnp
from jax import lax
from jax.experimental import pallas as pl
from jax.experimental.pallas import tpu as pltpu

EPS = 1e-4  # ForcePositive.eps


def _cdiv(a: int, b: int) -> int:
    return (a + b - 1) // b


def _round_up(x: int, m: int) -> int:
    return _cdiv(x, m) * m


def _force_positive_linear_kernel(x_ref, w_ref, b_ref, o_ref, *, precision):
    # model(x): Linear -> x @ W + b (MXU matmul, f32 accumulation)
    o = jnp.dot(
        x_ref[...], w_ref[...],
        preferred_element_type=jnp.float32, precision=precision,
    )
    o = o + b_ref[...].astype(jnp.float32)  # broadcast [1, TN] over [TB, TN]
    # ForcePositive: torch.max(o, eps) -> elementwise clamp on the VPU (f32)
    o_ref[...] = jnp.maximum(o, jnp.float32(EPS)).astype(o_ref.dtype)


@functools.partial(
    jax.jit,
    static_argnames=("block_b", "block_o", "force_pallas", "compute_dtype", "precision"),
)
def force_positive_forward(
    x, w, b, *,
    block_b: int = 1024,
    block_o: int = 512,
    force_pallas: bool = False,
    compute_dtype=jnp.float32,
    precision=lax.Precision.HIGHEST,
):
    """max(x @ w + b, eps) fused in one Pallas call.

    x: [B, H], w: [H, O], b: [1, O]  ->  [B, O] (x.dtype)
    """
    B, H = x.shape
    H2, O = w.shape
    assert H == H2 and b.shape == (1, O)
    out_dtype = x.dtype
    compute_dtype = jnp.dtype(compute_dtype)

    # ---- small-shape dispatch: a fused XLA op beats a grid=(1,) custom call.
    if not force_pallas and B < 128:
        o = jnp.dot(
            x.astype(compute_dtype), w.astype(compute_dtype),
            preferred_element_type=jnp.float32, precision=precision,
        ) + b.astype(jnp.float32)
        return jnp.maximum(o, jnp.float32(EPS)).astype(out_dtype)

    # ---- batch tile plan: bound padded waste to < ni*8 rows ----------------
    B8 = _round_up(B, 8)
    ni = _cdiv(B8, block_b)
    if ni == 1 and B8 >= 256:
        ni = 2  # v7x: make sure the second TensorCore has work
    TB = _round_up(_cdiv(B8, ni), 8)
    B_pad = ni * TB

    # ---- output-column tile plan: bounds resident-weight VMEM on v7x -------
    if O > block_o:
        nj = _cdiv(O, block_o)
        TN = _round_up(_cdiv(O, nj), 128)  # lane-dense tiles when O is split
        O_pad = nj * TN
    else:
        nj, TN, O_pad = 1, O, O            # full-extent O block, no padding

    # ---- conditional padding only (exact zero padding) ---------------------
    x_p = x if B_pad == B else jnp.pad(x, ((0, B_pad - B), (0, 0)))
    # For a fixed inner Linear this (rare, large-O only) weight padding can be
    # hoisted to parameter-setup time; it is conditional here so the common
    # case pays nothing.
    w_p = w if O_pad == O else jnp.pad(w, ((0, 0), (0, O_pad - O)))
    b_p = b if O_pad == O else jnp.pad(b, ((0, 0), (0, O_pad - O)))

    if compute_dtype != x.dtype:  # opt-in bf16 inputs: halves input HBM bytes
        x_p = x_p.astype(compute_dtype)
        w_p = w_p.astype(compute_dtype)

    itemsize = compute_dtype.itemsize
    block_bytes = (TB * H + H * TN) * itemsize + (TN + TB * TN) * 4
    vmem_limit = None
    if 2 * block_bytes > (12 << 20):  # beyond v5e's 16 MiB default scoped VMEM
        vmem_limit = min(int(2.5 * block_bytes), 100 << 20)

    cost = pl.CostEstimate(
        flops=2 * B_pad * H * O_pad,
        transcendentals=0,
        bytes_accessed=itemsize * (B_pad * H + H * O_pad)
        + 4 * (O_pad + B_pad * O_pad),
    )

    kernel = functools.partial(_force_positive_linear_kernel, precision=precision)

    out_p = pl.pallas_call(
        kernel,
        out_shape=jax.ShapeDtypeStruct((B_pad, O_pad), out_dtype),
        grid=(ni, nj),
        in_specs=[
            pl.BlockSpec((TB, H), lambda i, j: (i, 0)),   # x: tiled on batch, full H
            pl.BlockSpec((H, TN), lambda i, j: (0, j)),   # w: tiled on out-cols
            pl.BlockSpec((1, TN), lambda i, j: (0, j)),   # b: tiled on out-cols
        ],
        out_specs=pl.BlockSpec((TB, TN), lambda i, j: (i, j)),
        compiler_params=pltpu.CompilerParams(
            dimension_semantics=("parallel", "parallel"),  # megacore-shardable
            vmem_limit_bytes=vmem_limit,
        ),
        cost_estimate=cost,
    )(x_p, w_p, b_p)

    if B_pad != B or O_pad != O:
        out_p = out_p[:B, :O]
    return out_p


if __name__ == "__main__":
    key = jax.random.PRNGKey(0)
    k1, k2, k3, k4 = jax.random.split(key, 4)

    def make_case(kc, B, H, O):
        kx, kw, kb = jax.random.split(kc, 3)
        x = jax.random.normal(kx, (B, H), dtype=jnp.float32)
        w = jax.random.normal(kw, (H, O), dtype=jnp.float32) * 0.1
        b = jax.random.normal(kb, (1, O), dtype=jnp.float32) * 0.1
        return x, w, b

    def check(out, x, w, b):
        ref = jnp.maximum(
            jnp.dot(x, w, precision=lax.Precision.HIGHEST) + b, EPS
        )
        assert out.shape == ref.shape
        assert bool(jnp.all(out >= EPS))
        assert bool(jnp.allclose(out, ref, atol=1e-5, rtol=1e-5))

    # Case 1: the module's literal tiny shape, forced through the Pallas path.
    x, w, b = make_case(k1, 8, 32, 32)
    out = jax.block_until_ready(force_positive_forward(x, w, b, force_pallas=True))
    check(out, x, w, b)

    # Case 2: ragged batch -> 2 batch programs, no H/O padding, tiny row pad.
    x, w, b = make_case(k2, 300, 32, 32)
    out = jax.block_until_ready(force_positive_forward(x, w, b))
    check(out, x, w, b)

    # Case 3: output columns tiled across the grid (bounded-VMEM weight path).
    x, w, b = make_case(k3, 128, 64, 256)
    out = jax.block_until_ready(force_positive_forward(x, w, b, block_o=128))
    check(out, x, w, b)

    # Case 4: tiny shape via the automatic fused-XLA dispatch (no Pallas).
    x, w, b = make_case(k4, 8, 32, 32)
    out = jax.block_until_ready(force_positive_forward(x, w, b))
    check(out, x, w, b)

    print("KERNEL_OK")
</pallas_src>

<mosaic_0001>
module attributes {stable_mosaic.version = 11 : i64} {
  func.func @_force_positive_linear_kernel(%arg0: i32, %arg1: i32, %arg2: memref<8x32xf32, #tpu.memory_space<vmem>>, %arg3: memref<32x32xf32, #tpu.memory_space<vmem>>, %arg4: memref<1x32xf32, #tpu.memory_space<vmem>>, %arg5: memref<8x32xf32, #tpu.memory_space<vmem>>) attributes {dimension_semantics = [#tpu.dimension_semantics<parallel>, #tpu.dimension_semantics<parallel>], iteration_bounds = array<i64: 1, 1>, scalar_prefetch = 0 : i64, scratch_operands = 0 : i64, tpu.core_type = #tpu.core_type<tc>, window_params = [{transform_indices = @transform_0, window_bounds = array<i64: 8, 32>}, {transform_indices = @transform_1, window_bounds = array<i64: 32, 32>}, {transform_indices = @transform_2, window_bounds = array<i64: 1, 32>}, {transform_indices = @transform_3, window_bounds = array<i64: 8, 32>}]} {
    %c0 = arith.constant 0 : index
    %c0_0 = arith.constant 0 : index
    %0 = vector.load %arg2[%c0, %c0_0] : memref<8x32xf32, #tpu.memory_space<vmem>>, vector<8x32xf32>
    %c0_1 = arith.constant 0 : index
    %c0_2 = arith.constant 0 : index
    %1 = vector.load %arg3[%c0_1, %c0_2] : memref<32x32xf32, #tpu.memory_space<vmem>>, vector<32x32xf32>
    %cst = arith.constant dense<0.000000e+00> : vector<8x32xf32>
    %2 = tpu.matmul %0, %1, %cst {dimension_numbers = #tpu.dot_dimension_numbers<[1], [0], [0], [1], [0, 0, 1, 1], [], []>, precision = #tpu.contract_precision<fp32>} : vector<8x32xf32>, vector<32x32xf32>, vector<8x32xf32> -> vector<8x32xf32>
    %c0_3 = arith.constant 0 : index
    %c0_4 = arith.constant 0 : index
    %3 = vector.load %arg4[%c0_3, %c0_4] : memref<1x32xf32, #tpu.memory_space<vmem>>, vector<1x32xf32>
    %4 = vector.broadcast %3 : vector<1x32xf32> to vector<8x32xf32>
    %5 = arith.addf %2, %4 : vector<8x32xf32>
    %cst_5 = arith.constant 9.99999974E-5 : f32
    %6 = vector.broadcast %cst_5 : f32 to vector<8x32xf32>
    %7 = arith.maximumf %5, %6 : vector<8x32xf32>
    %c0_6 = arith.constant 0 : index
    %c0_7 = arith.constant 0 : index
    %8 = vector.load %arg5[%c0_6, %c0_7] : memref<8x32xf32, #tpu.memory_space<vmem>>, vector<8x32xf32>
    tpu.vector_store %arg5[%c0_6, %c0_7], %7 {strides = array<i32>} : memref<8x32xf32, #tpu.memory_space<vmem>>, vector<8x32xf32>,
    return
  }
  func.func @transform_0(%arg0: i32, %arg1: i32) -> (i32, i32) {
    %c0_i32 = arith.constant 0 : i32
    %c0_i32_0 = arith.constant 0 : i32
    return %arg0, %c0_i32 : i32, i32
  }
  func.func @transform_1(%arg0: i32, %arg1: i32) -> (i32, i32) {
    %c0_i32 = arith.constant 0 : i32
    %c0_i32_0 = arith.constant 0 : i32
    return %c0_i32, %arg1 : i32, i32
  }
  func.func @transform_2(%arg0: i32, %arg1: i32) -> (i32, i32) {
    %c0_i32 = arith.constant 0 : i32
    %c0_i32_0 = arith.constant 0 : i32
    return %c0_i32, %arg1 : i32, i32
  }
  func.func @transform_3(%arg0: i32, %arg1: i32) -> (i32, i32) {
    %c0_i32 = arith.constant 0 : i32
    return %arg0, %arg1 : i32, i32
  }
}

</mosaic_0001>

<llo_original>
// kernel: force_positive_forward.1
$region0: #{force_positive_forward.1}
  #allocation0 [shape = 'u32[]', space=smem, size = 0x4, offset = 0x4, fixed_abs, tag = 'smem constant byte address 0x4 - core index']
  #allocation1 [shape = 'u32[144,128]{1,0:T(1,128)}', space=vmem, size = 0x12000, scoped, tag = 'internal scratch']
  %s0 = inlined_call_operand.hbm [shape: f32[8,32], index: 0, kind: input, shape index: {}]
  %s1 = inlined_call_operand.hbm [shape: f32[32,32], index: 1, kind: input, shape index: {}]
  %s2 = inlined_call_operand.vmem [shape: f32[1,32], index: 2, kind: input, shape index: {}]
  %s3 = inlined_call_operand.hbm [shape: f32[8,32], index: 3, kind: output, shape index: {}]
  %s4 = sld [smem:[#allocation0]]
  $region30: #{force_positive_forward.1} parent=0
    _
  %s6 = ssub.s32 1, %s4
  %s7 = scalar_select 0, %s6, %s4
  $region1: #{force_positive_forward.1} parent=0
    #allocation2 [shape = 'u8[4096]{0}', space=vmem, size = 0x1000, scoped, tag = 'input window, operand 0, single buffered']
    #allocation3 [shape = 's32[1]{0}', space=sflag, size = 0x4, scoped, tag = 'scoped memory for force_positive_forward.1']
    #allocation4 [shape = 's32[1]{0}', space=sflag, size = 0x4, scoped, tag = 'scoped memory for force_positive_forward.1']
    #allocation5 [shape = 'u8[16384]{0}', space=vmem, size = 0x4000, scoped, tag = 'input window, operand 1, single buffered']
    #allocation6 [shape = 's32[1]{0}', space=sflag, size = 0x4, scoped, tag = 'scoped memory for force_positive_forward.1']
    #allocation7 [shape = 'u8[4096]{0}', space=vmem, size = 0x1000, scoped, tag = 'output window, operand 0, single buffered']
    %8 = vsyncpa [#allocation3], 0
    %9 = vsyncpa [#allocation6], 0
    %10 = vsyncpa [#allocation4], 0
    // Predicated region
    $region2: #{force_positive_forward.1} parent=1 // pred_check
      _
    $region3: #{force_positive_forward.1} parent=1 // pred_check_branch
      %12 = sbr.rel (0) target = $region5
    $region4: #{force_positive_forward.1} parent=1 // pred_region
      %s14 = ssub.s32 128, 128
      %15 = vsyncadd [#allocation3], %s14
      %s17 = sshll.u32 [#allocation2], 4
      %s18 = int_to_ptr.vmem [resolvable:$true] %s17
      %20 = dma.hbm_to_vmem [thread:$0]  %s0, 128, %s18, [#allocation3]
    $region5: #{force_positive_forward.1} parent=1 // pred_fallthru
      _
    // Predicated region
    $region6: #{force_positive_forward.1} parent=1 // pred_check
      _
    $region7: #{force_positive_forward.1} parent=1 // pred_check_branch
      %22 = sbr.rel (0) target = $region9
    $region8: #{force_positive_forward.1} parent=1 // pred_region
      %s24 = ssub.s32 512, 512
      %25 = vsyncadd [#allocation6], %s24
      %s26 = sshll.u32 [#allocation5], 4
      %s27 = int_to_ptr.vmem [resolvable:$true] %s26
      %32 = dma.hbm_to_vmem [thread:$0]  %s1, 512, %s27, [#allocation6], 128, 128, 8
    $region9: #{force_positive_forward.1} parent=1 // pred_fallthru
      _
    // Predicated region
    $region10: #{force_positive_forward.1} parent=1 // pred_check
      _
    $region11: #{force_positive_forward.1} parent=1 // pred_check_branch
      %34 = sbr.rel (0) target = $region13
    $region12: #{force_positive_forward.1} parent=1 // pred_region
      _
    $region13: #{force_positive_forward.1} parent=1 // pred_fallthru
      _
    // Predicated region
    $region14: #{force_positive_forward.1} parent=1 // pred_check
      _
    $region15: #{force_positive_forward.1} parent=1 // pred_check_branch
      %36 = sbr.rel (0) target = $region17
    $region16: #{force_positive_forward.1} parent=1 // pred_region
      %37 = dma.done [#allocation3], 128
    $region17: #{force_positive_forward.1} parent=1 // pred_fallthru
      _
    // Predicated region
    $region18: #{force_positive_forward.1} parent=1 // pred_check
      _
    $region19: #{force_positive_forward.1} parent=1 // pred_check_branch
      %39 = sbr.rel (0) target = $region21
    $region20: #{force_positive_forward.1} parent=1 // pred_region
      %40 = dma.done [#allocation6], 512
    $region21: #{force_positive_forward.1} parent=1 // pred_fallthru
      _
    %v41 = vld [vmem:[#allocation2] sm:$0xff]
    %v42 = vld [vmem:[#allocation5] sm:$0xff]
    %v43 = vld [vmem:[#allocation5 + $0x8] sm:$0xff]
    %v44 = vld [vmem:[#allocation5 + $0x10] sm:$0xff]
    %v45 = vld [vmem:[#allocation5 + $0x18] sm:$0xff]
    %v46 = vld [vmem:[%s2] sm:$0x1]
    %v48 = vlaneseq
    %v49 = vshrl.u32 %v48, 7
    %v50 = vsub.s32 0, %v49
    %v51 = vrot.slane %v46, %v50
    %vm53 = vcmask 261120
    %v55 = vsel %vm53, %v41, 0
    %57 = vmatprep.subr.mxu0 0.0
    %v58 = vand.u32 %v42, 4294901760
    %59 = vmatpush1.msra.mxu0 %v58
    %60 = vmatprep.subr.mxu0 0.0
    %v61 = vand.u32 %v43, 4294901760
    %62 = vmatpush1.msra.mxu0 %v61
    %63 = vmatprep.subr.mxu0 0.0
    %v64 = vand.u32 %v44, 4294901760
    %65 = vmatpush1.msra.mxu0 %v64
    %66 = vmatprep.subr.mxu0 0.0
    %v67 = vand.u32 %v45, 4294901760
    %68 = vmatpush1.msra.mxu0 %v67
    %69 = vmatprep.subr.mxu0 0.0
    %70 = vmatpush1.msra.mxu0 0.0
    %71 = vmatprep.subr.mxu0 0.0
    %72 = vmatpush1.msra.mxu0 0.0
    %73 = vmatprep.subr.mxu0 0.0
    %74 = vmatpush1.msra.mxu0 0.0
    %75 = vmatprep.subr.mxu0 0.0
    %76 = vmatpush1.msra.mxu0 0.0
    %77 = vmatprep.subr.mxu0 0.0
    %78 = vmatpush1.msra.mxu0 0.0
    %79 = vmatprep.subr.mxu0 0.0
    %80 = vmatpush1.msra.mxu0 0.0
    %81 = vmatprep.subr.mxu0 0.0
    %82 = vmatpush1.msra.mxu0 0.0
    %83 = vmatprep.subr.mxu0 0.0
    %84 = vmatpush1.msra.mxu0 0.0
    %85 = vmatprep.subr.mxu0 0.0
    %86 = vmatpush1.msra.mxu0 0.0
    %87 = vmatprep.subr.mxu0 0.0
    %88 = vmatpush1.msra.mxu0 0.0
    %89 = vmatprep.subr.mxu0 0.0
    %90 = vmatpush1.msra.mxu0 0.0
    %91 = vmatprep.subr.mxu0 0.0
    %92 = vmatpush1.msra.mxu0 0.0
    %93 = vmatprep.subr.mxu0 0.0
    %94 = vmatpush1.msra.mxu0 0.0
    %95 = vmatprep.subr.mxu0 0.0
    %96 = vmatpush1.msra.mxu0 0.0
    %97 = vmatprep.subr.mxu0 0.0
    %98 = vmatpush1.msra.mxu0 0.0
    %99 = vmatprep.subr.mxu0 0.0
    %100 = vmatpush1.msra.mxu0 0.0
    %101 = vmatprep.subr.mxu0 0.0
    %102 = vmatpush1.msra.mxu0 0.0
    %103 = vmatprep.subr.mxu0 0.0
    %104 = vmatpush1.msra.mxu0 0.0
    %105 = vmatprep.subr.mxu0 0.0
    %106 = vmatpush1.msra.mxu0 0.0
    %107 = vmatprep.subr.mxu0 0.0
    %108 = vmatpush1.msra.mxu0 0.0
    %109 = vmatprep.subr.mxu0 0.0
    %110 = vmatpush1.msra.mxu0 0.0
    %111 = vmatprep.subr.mxu0 0.0
    %112 = vmatpush1.msra.mxu0 0.0
    %113 = vmatprep.subr.mxu0 0.0
    %114 = vmatpush1.msra.mxu0 0.0
    %115 = vmatprep.subr.mxu0 0.0
    %116 = vmatpush1.msra.mxu0 0.0
    %117 = vmatprep.subr.mxu0 0.0
    %118 = vmatpush1.msra.mxu0 0.0
    %119 = vmatprep.subr.mxu0 0.0
    %120 = vmatpush1.msra.mxu0 0.0
    %121 = vmatprep.subr.mxu0 0.0
    %122 = vmatpush1.msra.mxu0 0.0
    %123 = vmatprep.subr.mxu0 0.0
    %124 = vmatpush1.msra.mxu0 0.0
    %125 = vmatprep.mubr.f32.mxu0 0.0
    %v126 = vand.u32 %v55, 4294901760
    %v127 = vsub.f32 %v55, %v126
    %v128 = vand.u32 %v127, 4294901760
    %v129 = vsub.f32 %v127, %v128
    %v130 = vand.u32 %v129, 4294901760
    %131 = vmatmul.mubr.f32.gmra.mrb[0].mxu0 %v130
    %v132 = vpop.f32.mrb[0].mxu0
    %v133 = vadd.f32 %v51, %v132
    %v134 = vpop.f32.mrb[0].mxu0
    %135 = vdwg.mxu0
    %136 = vmatprep.subr.mxu0 0.0
    %v137 = vand.u32 %v42, 4294901760
    %v138 = vsub.f32 %v42, %v137
    %v139 = vand.u32 %v138, 4294901760
    %v140 = vsub.f32 %v138, %v139
    %v141 = vand.u32 %v140, 4294901760
    %142 = vmatpush1.msra.mxu0 %v141
    %143 = vmatprep.subr.mxu0 0.0
    %v144 = vand.u32 %v43, 4294901760
    %v145 = vsub.f32 %v43, %v144
    %v146 = vand.u32 %v145, 4294901760
    %v147 = vsub.f32 %v145, %v146
    %v148 = vand.u32 %v147, 4294901760
    %149 = vmatpush1.msra.mxu0 %v148
    %150 = vmatprep.subr.mxu0 0.0
    %v151 = vand.u32 %v44, 4294901760
    %v152 = vsub.f32 %v44, %v151
    %v153 = vand.u32 %v152, 4294901760
    %v154 = vsub.f32 %v152, %v153
    %v155 = vand.u32 %v154, 4294901760
    %156 = vmatpush1.msra.mxu0 %v155
    %157 = vmatprep.subr.mxu0 0.0
    %v158 = vand.u32 %v45, 4294901760
    %v159 = vsub.f32 %v45, %v158
    %v160 = vand.u32 %v159, 4294901760
    %v161 = vsub.f32 %v159, %v160
    %v162 = vand.u32 %v161, 4294901760
    %163 = vmatpush1.msra.mxu0 %v162
    %164 = vmatprep.subr.mxu0 0.0
    %165 = vmatpush1.msra.mxu0 0.0
    %166 = vmatprep.subr.mxu0 0.0
    %167 = vmatpush1.msra.mxu0 0.0
    %168 = vmatprep.subr.mxu0 0.0
    %169 = vmatpush1.msra.mxu0 0.0
    %170 = vmatprep.subr.mxu0 0.0
    %171 = vmatpush1.msra.mxu0 0.0
    %172 = vmatprep.subr.mxu0 0.0
    %173 = vmatpush1.msra.mxu0 0.0
    %174 = vmatprep.subr.mxu0 0.0
    %175 = vmatpush1.msra.mxu0 0.0
    %176 = vmatprep.subr.mxu0 0.0
    %177 = vmatpush1.msra.mxu0 0.0
    %178 = vmatprep.subr.mxu0 0.0
    %179 = vmatpush1.msra.mxu0 0.0
    %180 = vmatprep.subr.mxu0 0.0
    %181 = vmatpush1.msra.mxu0 0.0
    %182 = vmatprep.subr.mxu0 0.0
    %183 = vmatpush1.msra.mxu0 0.0
    %184 = vmatprep.subr.mxu0 0.0
    %185 = vmatpush1.msra.mxu0 0.0
    %186 = vmatprep.subr.mxu0 0.0
    %187 = vmatpush1.msra.mxu0 0.0
    %188 = vmatprep.subr.mxu0 0.0
    %189 = vmatpush1.msra.mxu0 0.0
    %190 = vmatprep.subr.mxu0 0.0
    %191 = vmatpush1.msra.mxu0 0.0
    %192 = vmatprep.subr.mxu0 0.0
    %193 = vmatpush1.msra.mxu0 0.0
    %194 = vmatprep.subr.mxu0 0.0
    %195 = vmatpush1.msra.mxu0 0.0
    %196 = vmatprep.subr.mxu0 0.0
    %197 = vmatpush1.msra.mxu0 0.0
    %198 = vmatprep.subr.mxu0 0.0
    %199 = vmatpush1.msra.mxu0 0.0
    %200 = vmatprep.subr.mxu0 0.0
    %201 = vmatpush1.msra.mxu0 0.0
    %202 = vmatprep.subr.mxu0 0.0
    %203 = vmatpush1.msra.mxu0 0.0
    %204 = vmatprep.subr.mxu0 0.0
    %205 = vmatpush1.msra.mxu0 0.0
    %206 = vmatprep.subr.mxu0 0.0
    %207 = vmatpush1.msra.mxu0 0.0
    %208 = vmatprep.subr.mxu0 0.0
    %209 = vmatpush1.msra.mxu0 0.0
    %210 = vmatprep.subr.mxu0 0.0
    %211 = vmatpush1.msra.mxu0 0.0
    %212 = vmatprep.subr.mxu0 0.0
    %213 = vmatpush1.msra.mxu0 0.0
    %214 = vmatprep.subr.mxu0 0.0
    %215 = vmatpush1.msra.mxu0 0.0
    %216 = vmatprep.subr.mxu0 0.0
    %217 = vmatpush1.msra.mxu0 0.0
    %218 = vmatprep.subr.mxu0 0.0
    %219 = vmatpush1.msra.mxu0 0.0
    %220 = vmatprep.mubr.f32.mxu0 0.0
    %v221 = vand.u32 %v55, 4294901760
    %222 = vmatmul.mubr.f32.gmra.mrb[0].mxu0 %v221
    %v223 = vpop.f32.mrb[0].mxu0
    %v224 = vadd.f32 %v133, %v223
    %v225 = vpop.f32.mrb[0].mxu0
    %226 = vdwg.mxu0
    %227 = vmatprep.subr.mxu0 0.0
    %v228 = vand.u32 %v42, 4294901760
    %v229 = vsub.f32 %v42, %v228
    %230 = vmatpush1.msra.mxu0 %v229
    %231 = vmatprep.subr.mxu0 0.0
    %v232 = vand.u32 %v43, 4294901760
    %v233 = vsub.f32 %v43, %v232
    %234 = vmatpush1.msra.mxu0 %v233
    %235 = vmatprep.subr.mxu0 0.0
    %v236 = vand.u32 %v44, 4294901760
    %v237 = vsub.f32 %v44, %v236
    %238 = vmatpush1.msra.mxu0 %v237
    %239 = vmatprep.subr.mxu0 0.0
    %v240 = vand.u32 %v45, 4294901760
    %v241 = vsub.f32 %v45, %v240
    %242 = vmatpush1.msra.mxu0 %v241
    %243 = vmatprep.subr.mxu0 0.0
    %244 = vmatpush1.msra.mxu0 0.0
    %245 = vmatprep.subr.mxu0 0.0
    %246 = vmatpush1.msra.mxu0 0.0
    %247 = vmatprep.subr.mxu0 0.0
    %248 = vmatpush1.msra.mxu0 0.0
    %249 = vmatprep.subr.mxu0 0.0
    %250 = vmatpush1.msra.mxu0 0.0
    %251 = vmatprep.subr.mxu0 0.0
    %252 = vmatpush1.msra.mxu0 0.0
    %253 = vmatprep.subr.mxu0 0.0
    %254 = vmatpush1.msra.mxu0 0.0
    %255 = vmatprep.subr.mxu0 0.0
    %256 = vmatpush1.msra.mxu0 0.0
    %257 = vmatprep.subr.mxu0 0.0
    %258 = vmatpush1.msra.mxu0 0.0
    %259 = vmatprep.subr.mxu0 0.0
    %260 = vmatpush1.msra.mxu0 0.0
    %261 = vmatprep.subr.mxu0 0.0
    %262 = vmatpush1.msra.mxu0 0.0
    %263 = vmatprep.subr.mxu0 0.0
    %264 = vmatpush1.msra.mxu0 0.0
    %265 = vmatprep.subr.mxu0 0.0
    %266 = vmatpush1.msra.mxu0 0.0
    %267 = vmatprep.subr.mxu0 0.0
    %268 = vmatpush1.msra.mxu0 0.0
    %269 = vmatprep.subr.mxu0 0.0
    %270 = vmatpush1.msra.mxu0 0.0
    %271 = vmatprep.subr.mxu0 0.0
    %272 = vmatpush1.msra.mxu0 0.0
    %273 = vmatprep.subr.mxu0 0.0
    %274 = vmatpush1.msra.mxu0 0.0
    %275 = vmatprep.subr.mxu0 0.0
    %276 = vmatpush1.msra.mxu0 0.0
    %277 = vmatprep.subr.mxu0 0.0
    %278 = vmatpush1.msra.mxu0 0.0
    %279 = vmatprep.subr.mxu0 0.0
    %280 = vmatpush1.msra.mxu0 0.0
    %281 = vmatprep.subr.mxu0 0.0
    %282 = vmatpush1.msra.mxu0 0.0
    %283 = vmatprep.subr.mxu0 0.0
    %284 = vmatpush1.msra.mxu0 0.0
    %285 = vmatprep.subr.mxu0 0.0
    %286 = vmatpush1.msra.mxu0 0.0
    %287 = vmatprep.subr.mxu0 0.0
    %288 = vmatpush1.msra.mxu0 0.0
    %289 = vmatprep.subr.mxu0 0.0
    %290 = vmatpush1.msra.mxu0 0.0
    %291 = vmatprep.subr.mxu0 0.0
    %292 = vmatpush1.msra.mxu0 0.0
    %293 = vmatprep.subr.mxu0 0.0
    %294 = vmatpush1.msra.mxu0 0.0
    %295 = vmatprep.subr.mxu0 0.0
    %296 = vmatpush1.msra.mxu0 0.0
    %297 = vmatprep.subr.mxu0 0.0
    %298 = vmatpush1.msra.mxu0 0.0
    %299 = vmatprep.mubr.f32.mxu0 0.0
    %v300 = vand.u32 %v55, 4294901760
    %v301 = vsub.f32 %v55, %v300
    %302 = vmatmul.mubr.f32.gmra.mrb[0].mxu0 %v301
    %v303 = vpop.f32.mrb[0].mxu0
    %v304 = vadd.f32 %v224, %v303
    %v305 = vpop.f32.mrb[0].mxu0
    %306 = vdwg.mxu0
    %307 = vmatprep.subr.mxu0 0.0
    %v308 = vand.u32 %v42, 4294901760
    %309 = vmatpush1.msra.mxu0 %v308
    %310 = vmatprep.subr.mxu0 0.0
    %v311 = vand.u32 %v43, 4294901760
    %312 = vmatpush1.msra.mxu0 %v311
    %313 = vmatprep.subr.mxu0 0.0
    %v314 = vand.u32 %v44, 4294901760
    %315 = vmatpush1.msra.mxu0 %v314
    %316 = vmatprep.subr.mxu0 0.0
    %v317 = vand.u32 %v45, 4294901760
    %318 = vmatpush1.msra.mxu0 %v317
    %319 = vmatprep.subr.mxu0 0.0
    %320 = vmatpush1.msra.mxu0 0.0
    %321 = vmatprep.subr.mxu0 0.0
    %322 = vmatpush1.msra.mxu0 0.0
    %323 = vmatprep.subr.mxu0 0.0
    %324 = vmatpush1.msra.mxu0 0.0
    %325 = vmatprep.subr.mxu0 0.0
    %326 = vmatpush1.msra.mxu0 0.0
    %327 = vmatprep.subr.mxu0 0.0
    %328 = vmatpush1.msra.mxu0 0.0
    %329 = vmatprep.subr.mxu0 0.0
    %330 = vmatpush1.msra.mxu0 0.0
    %331 = vmatprep.subr.mxu0 0.0
    %332 = vmatpush1.msra.mxu0 0.0
    %333 = vmatprep.subr.mxu0 0.0
    %334 = vmatpush1.msra.mxu0 0.0
    %335 = vmatprep.subr.mxu0 0.0
    %336 = vmatpush1.msra.mxu0 0.0
    %337 = vmatprep.subr.mxu0 0.0
    %338 = vmatpush1.msra.mxu0 0.0
    %339 = vmatprep.subr.mxu0 0.0
    %340 = vmatpush1.msra.mxu0 0.0
    %341 = vmatprep.subr.mxu0 0.0
    %342 = vmatpush1.msra.mxu0 0.0
    %343 = vmatprep.subr.mxu0 0.0
    %344 = vmatpush1.msra.mxu0 0.0
    %345 = vmatprep.subr.mxu0 0.0
    %346 = vmatpush1.msra.mxu0 0.0
    %347 = vmatprep.subr.mxu0 0.0
    %348 = vmatpush1.msra.mxu0 0.0
    %349 = vmatprep.subr.mxu0 0.0
    %350 = vmatpush1.msra.mxu0 0.0
    %351 = vmatprep.subr.mxu0 0.0
    %352 = vmatpush1.msra.mxu0 0.0
    %353 = vmatprep.subr.mxu0 0.0
    %354 = vmatpush1.msra.mxu0 0.0
    %355 = vmatprep.subr.mxu0 0.0
    %356 = vmatpush1.msra.mxu0 0.0
    %357 = vmatprep.subr.mxu0 0.0
    %358 = vmatpush1.msra.mxu0 0.0
    %359 = vmatprep.subr.mxu0 0.0
    %360 = vmatpush1.msra.mxu0 0.0
    %361 = vmatprep.subr.mxu0 0.0
    %362 = vmatpush1.msra.mxu0 0.0
    %363 = vmatprep.subr.mxu0 0.0
    %364 = vmatpush1.msra.mxu0 0.0
    %365 = vmatprep.subr.mxu0 0.0
    %366 = vmatpush1.msra.mxu0 0.0
    %367 = vmatprep.subr.mxu0 0.0
    %368 = vmatpush1.msra.mxu0 0.0
    %369 = vmatprep.subr.mxu0 0.0
    %370 = vmatpush1.msra.mxu0 0.0
    %371 = vmatprep.subr.mxu0 0.0
    %372 = vmatpush1.msra.mxu0 0.0
    %373 = vmatprep.subr.mxu0 0.0
    %374 = vmatpush1.msra.mxu0 0.0
    %375 = vmatprep.mubr.f32.mxu0 0.0
    %v376 = vand.u32 %v55, 4294901760
    %v377 = vsub.f32 %v55, %v376
    %v378 = vand.u32 %v377, 4294901760
    %379 = vmatmul.mubr.f32.gmra.mrb[0].mxu0 %v378
    %v380 = vpop.f32.mrb[0].mxu0
    %v381 = vadd.f32 %v304, %v380
    %v382 = vpop.f32.mrb[0].mxu0
    %383 = vdwg.mxu0
    %384 = vmatprep.subr.mxu0 0.0
    %v385 = vand.u32 %v42, 4294901760
    %v386 = vsub.f32 %v42, %v385
    %v387 = vand.u32 %v386, 4294901760
    %388 = vmatpush1.msra.mxu0 %v387
    %389 = vmatprep.subr.mxu0 0.0
    %v390 = vand.u32 %v43, 4294901760
    %v391 = vsub.f32 %v43, %v390
    %v392 = vand.u32 %v391, 4294901760
    %393 = vmatpush1.msra.mxu0 %v392
    %394 = vmatprep.subr.mxu0 0.0
    %v395 = vand.u32 %v44, 4294901760
    %v396 = vsub.f32 %v44, %v395
    %v397 = vand.u32 %v396, 4294901760
    %398 = vmatpush1.msra.mxu0 %v397
    %399 = vmatprep.subr.mxu0 0.0
    %v400 = vand.u32 %v45, 4294901760
    %v401 = vsub.f32 %v45, %v400
    %v402 = vand.u32 %v401, 4294901760
    %403 = vmatpush1.msra.mxu0 %v402
    %404 = vmatprep.subr.mxu0 0.0
    %405 = vmatpush1.msra.mxu0 0.0
    %406 = vmatprep.subr.mxu0 0.0
    %407 = vmatpush1.msra.mxu0 0.0
    %408 = vmatprep.subr.mxu0 0.0
    %409 = vmatpush1.msra.mxu0 0.0
    %410 = vmatprep.subr.mxu0 0.0
    %411 = vmatpush1.msra.mxu0 0.0
    %412 = vmatprep.subr.mxu0 0.0
    %413 = vmatpush1.msra.mxu0 0.0
    %414 = vmatprep.subr.mxu0 0.0
    %415 = vmatpush1.msra.mxu0 0.0
    %416 = vmatprep.subr.mxu0 0.0
    %417 = vmatpush1.msra.mxu0 0.0
    %418 = vmatprep.subr.mxu0 0.0
    %419 = vmatpush1.msra.mxu0 0.0
    %420 = vmatprep.subr.mxu0 0.0
    %421 = vmatpush1.msra.mxu0 0.0
    %422 = vmatprep.subr.mxu0 0.0
    %423 = vmatpush1.msra.mxu0 0.0
    %424 = vmatprep.subr.mxu0 0.0
    %425 = vmatpush1.msra.mxu0 0.0
    %426 = vmatprep.subr.mxu0 0.0
    %427 = vmatpush1.msra.mxu0 0.0
    %428 = vmatprep.subr.mxu0 0.0
    %429 = vmatpush1.msra.mxu0 0.0
    %430 = vmatprep.subr.mxu0 0.0
    %431 = vmatpush1.msra.mxu0 0.0
    %432 = vmatprep.subr.mxu0 0.0
    %433 = vmatpush1.msra.mxu0 0.0
    %434 = vmatprep.subr.mxu0 0.0
    %435 = vmatpush1.msra.mxu0 0.0
    %436 = vmatprep.subr.mxu0 0.0
    %437 = vmatpush1.msra.mxu0 0.0
    %438 = vmatprep.subr.mxu0 0.0
    %439 = vmatpush1.msra.mxu0 0.0
    %440 = vmatprep.subr.mxu0 0.0
    %441 = vmatpush1.msra.mxu0 0.0
    %442 = vmatprep.subr.mxu0 0.0
    %443 = vmatpush1.msra.mxu0 0.0
    %444 = vmatprep.subr.mxu0 0.0
    %445 = vmatpush1.msra.mxu0 0.0
    %446 = vmatprep.subr.mxu0 0.0
    %447 = vmatpush1.msra.mxu0 0.0
    %448 = vmatprep.subr.mxu0 0.0
    %449 = vmatpush1.msra.mxu0 0.0
    %450 = vmatprep.subr.mxu0 0.0
    %451 = vmatpush1.msra.mxu0 0.0
    %452 = vmatprep.subr.mxu0 0.0
    %453 = vmatpush1.msra.mxu0 0.0
    %454 = vmatprep.subr.mxu0 0.0
    %455 = vmatpush1.msra.mxu0 0.0
    %456 = vmatprep.subr.mxu0 0.0
    %457 = vmatpush1.msra.mxu0 0.0
    %458 = vmatprep.subr.mxu0 0.0
    %459 = vmatpush1.msra.mxu0 0.0
    %460 = vmatprep.mubr.f32.mxu0 0.0
    %v461 = vand.u32 %v55, 4294901760
    %462 = vmatmul.mubr.f32.gmra.mrb[0].mxu0 %v461
    %v463 = vpop.f32.mrb[0].mxu0
    %v464 = vadd.f32 %v381, %v463
    %v465 = vpop.f32.mrb[0].mxu0
    %466 = vdwg.mxu0
    %467 = vmatprep.subr.mxu0 0.0
    %v468 = vand.u32 %v42, 4294901760
    %469 = vmatpush1.msra.mxu0 %v468
    %470 = vmatprep.subr.mxu0 0.0
    %v471 = vand.u32 %v43, 4294901760
    %472 = vmatpush1.msra.mxu0 %v471
    %473 = vmatprep.subr.mxu0 0.0
    %v474 = vand.u32 %v44, 4294901760
    %475 = vmatpush1.msra.mxu0 %v474
    %476 = vmatprep.subr.mxu0 0.0
    %v477 = vand.u32 %v45, 4294901760
    %478 = vmatpush1.msra.mxu0 %v477
    %479 = vmatprep.subr.mxu0 0.0
    %480 = vmatpush1.msra.mxu0 0.0
    %481 = vmatprep.subr.mxu0 0.0
    %482 = vmatpush1.msra.mxu0 0.0
    %483 = vmatprep.subr.mxu0 0.0
    %484 = vmatpush1.msra.mxu0 0.0
    %485 = vmatprep.subr.mxu0 0.0
    %486 = vmatpush1.msra.mxu0 0.0
    %487 = vmatprep.subr.mxu0 0.0
    %488 = vmatpush1.msra.mxu0 0.0
    %489 = vmatprep.subr.mxu0 0.0
    %490 = vmatpush1.msra.mxu0 0.0
    %491 = vmatprep.subr.mxu0 0.0
    %492 = vmatpush1.msra.mxu0 0.0
    %493 = vmatprep.subr.mxu0 0.0
    %494 = vmatpush1.msra.mxu0 0.0
    %495 = vmatprep.subr.mxu0 0.0
    %496 = vmatpush1.msra.mxu0 0.0
    %497 = vmatprep.subr.mxu0 0.0
    %498 = vmatpush1.msra.mxu0 0.0
    %499 = vmatprep.subr.mxu0 0.0
    %500 = vmatpush1.msra.mxu0 0.0
    %501 = vmatprep.subr.mxu0 0.0
    %502 = vmatpush1.msra.mxu0 0.0
    %503 = vmatprep.subr.mxu0 0.0
    %504 = vmatpush1.msra.mxu0 0.0
    %505 = vmatprep.subr.mxu0 0.0
    %506 = vmatpush1.msra.mxu0 0.0
    %507 = vmatprep.subr.mxu0 0.0
    %508 = vmatpush1.msra.mxu0 0.0
    %509 = vmatprep.subr.mxu0 0.0
    %510 = vmatpush1.msra.mxu0 0.0
    %511 = vmatprep.subr.mxu0 0.0
    %512 = vmatpush1.msra.mxu0 0.0
    %513 = vmatprep.subr.mxu0 0.0
    %514 = vmatpush1.msra.mxu0 0.0
    %515 = vmatprep.subr.mxu0 0.0
    %516 = vmatpush1.msra.mxu0 0.0
    %517 = vmatprep.subr.mxu0 0.0
    %518 = vmatpush1.msra.mxu0 0.0
    %519 = vmatprep.subr.mxu0 0.0
    %520 = vmatpush1.msra.mxu0 0.0
    %521 = vmatprep.subr.mxu0 0.0
    %522 = vmatpush1.msra.mxu0 0.0
    %523 = vmatprep.subr.mxu0 0.0
    %524 = vmatpush1.msra.mxu0 0.0
    %525 = vmatprep.subr.mxu0 0.0
    %526 = vmatpush1.msra.mxu0 0.0
    %527 = vmatprep.subr.mxu0 0.0
    %528 = vmatpush1.msra.mxu0 0.0
    %529 = vmatprep.subr.mxu0 0.0
    %530 = vmatpush1.msra.mxu0 0.0
    %531 = vmatprep.subr.mxu0 0.0
    %532 = vmatpush1.msra.mxu0 0.0
    %533 = vmatprep.subr.mxu0 0.0
    %534 = vmatpush1.msra.mxu0 0.0
    %535 = vmatprep.mubr.f32.mxu0 0.0
    %v536 = vand.u32 %v55, 4294901760
    %537 = vmatmul.mubr.f32.gmra.mrb[0].mxu0 %v536
    %v538 = vpop.f32.mrb[0].mxu0
    %v539 = vadd.f32 %v464, %v538
    %v540 = vpop.f32.mrb[0].mxu0
    %541 = vdwg.mxu0
    %v542 = vmax.f32 %v539, 0.0001
    %543 = vst.msk [vmem:[#allocation7] sm:$0xff] %vm53, %v542
    // Predicated region
    $region22: #{force_positive_forward.1} parent=1 // pred_check
      _
    $region23: #{force_positive_forward.1} parent=1 // pred_check_branch
      %545 = sbr.rel (0) target = $region25
    $region24: #{force_positive_forward.1} parent=1 // pred_region
      %s547 = ssub.s32 128, 128
      %548 = vsyncadd [#allocation4], %s547
      %s550 = sshll.u32 [#allocation7], 4
      %s551 = int_to_ptr.vmem [resolvable:$true] %s550
      %553 = dma.vmem_to_hbm [thread:$0]  %s551, 128, %s3, [#allocation4]
    $region25: #{force_positive_forward.1} parent=1 // pred_fallthru
      _
    // Predicated region
    $region26: #{force_positive_forward.1} parent=1 // pred_check
      _
    $region27: #{force_positive_forward.1} parent=1 // pred_check_branch
      %555 = sbr.rel (0) target = $region29
    $region28: #{force_positive_forward.1} parent=1 // pred_region
      %556 = dma.done [#allocation4], 128
    $region29: #{force_positive_forward.1} parent=1 // pred_fallthru
      _
    %557 = vsyncpa [#allocation3], 1
    %558 = vsyncpa [#allocation6], 1
    %559 = vsyncpa [#allocation4], 1

</llo_original>
